<compile_context>
chip_gen: v6e
topology: v6e:2x2x1
jax: 0.10.0
libtpu: 0.0.40
codegen_flags: <defaults>
</compile_context>

<pallas_src>
import math

import jax
import jax.numpy as jnp
from jax.experimental import pallas as pl
from jax.experimental.pallas import tpu as pltpu


_INV_SQRT2 = 1.0 / math.sqrt(2.0)


def _round_up(x, m):
    return ((x + m - 1) // m) * m


def _erf_f32(x):
    """erf(x) in f32 via Abramowitz & Stegun 7.1.26 (|error| <= 1.5e-7).

    Uses only mul/add/div/exp so it lowers cleanly in Pallas TPU (VPU + EUP).
    """
    a = jnp.abs(x)
    t = 1.0 / (1.0 + 0.3275911 * a)
    poly = t * (0.254829592 + t * (-0.284496736 + t * (1.421413741
            + t * (-1.453152027 + t * 1.061405429))))
    y = 1.0 - poly * jnp.exp(-a * a)
    return jnp.where(x >= 0.0, y, -y)


def _ff_kernel(x_ref, w1_ref, b1_ref, w2_ref, b2_ref, o_ref, acc_ref):
    # x_ref:  (tm, dim_p)        [compute dtype]
    # w1_ref: (dim_p, th)        [compute dtype]    b1_ref: (1, th)    [f32]
    # w2_ref: (th, dim_p)        [compute dtype]    b2_ref: (1, dim_p) [f32]
    # o_ref:  (tm, dim_p)        [output dtype]
    # acc_ref:(tm, dim_p)        [f32 scratch, resident across the hidden axis]
    k = pl.program_id(1)

    @pl.when(k == 0)
    def _():
        acc_ref[...] = jnp.zeros_like(acc_ref)

    # First Linear on this hidden chunk (f32 accumulation on the MXU).
    h = jnp.dot(x_ref[...], w1_ref[...], preferred_element_type=jnp.float32)
    h = h + b1_ref[...].astype(jnp.float32)

    # Exact GELU in f32: 0.5 * h * (1 + erf(h / sqrt(2)))  -- matches nn.GELU().
    h = 0.5 * h * (1.0 + _erf_f32(h * _INV_SQRT2))

    # Second Linear: accumulate this hidden chunk's contribution.
    acc_ref[...] += jnp.dot(h.astype(w2_ref.dtype), w2_ref[...],
                            preferred_element_type=jnp.float32)

    @pl.when(k == pl.num_programs(1) - 1)
    def _():
        o_ref[...] = (acc_ref[...] + b2_ref[...].astype(jnp.float32)).astype(o_ref.dtype)


def feed_forward(x, w1, b1, w2, b2, *, row_tile=256, max_hidden_chunk=2048,
                 compute_dtype=jnp.bfloat16):
    """Fused MLP-Mixer FeedForward.

    x:  (batch, seq, dim)
    w1: (dim, hidden)   b1: (hidden,)
    w2: (hidden, dim)   b2: (dim,)
    Returns (batch, seq, dim) in x.dtype. Matmul operands are cast to
    `compute_dtype` (bf16 by default); accumulation and GELU stay in f32.
    """
    batch, seq, dim = x.shape
    hidden = w1.shape[1]
    out_dtype = x.dtype
    rows = batch * seq

    # ---- lane-dense padding of the feature dims (multiples of 128) ----------
    dim_p = _round_up(dim, 128)
    hidden_p = _round_up(hidden, 128)

    # ---- hidden-chunk size (caps the live f32 GELU intermediate) ------------
    if hidden_p <= max_hidden_chunk:
        th = hidden_p
    else:
        th = max_hidden_chunk
        hidden_p = _round_up(hidden_p, th)      # zero-pad so chunks divide evenly
    num_k = hidden_p // th

    # ---- row tiling: shrink the tile for tiny inputs, pad ragged rows -------
    tm = min(row_tile, _round_up(rows, 8))
    tm = _round_up(tm, 8)
    rows_p = _round_up(rows, tm)
    num_i = rows_p // tm

    # ---- prepare (cast + zero-pad) operands ----------------------------------
    x2d = x.reshape(rows, dim).astype(compute_dtype)
    x2d = jnp.pad(x2d, ((0, rows_p - rows), (0, dim_p - dim)))

    w1_p = jnp.pad(w1.astype(compute_dtype), ((0, dim_p - dim), (0, hidden_p - hidden)))
    w2_p = jnp.pad(w2.astype(compute_dtype), ((0, hidden_p - hidden), (0, dim_p - dim)))
    b1_p = jnp.pad(b1.astype(jnp.float32), (0, hidden_p - hidden)).reshape(1, hidden_p)
    b2_p = jnp.pad(b2.astype(jnp.float32), (0, dim_p - dim)).reshape(1, dim_p)

    # ---- explicit VMEM budget (cap at 64 MiB so it also fits v7x) -----------
    cbytes = jnp.dtype(compute_dtype).itemsize
    obytes = jnp.dtype(out_dtype).itemsize
    est = 2 * 2 * (dim_p * th) * cbytes        # W1 + W2 blocks, double-buffered
    est += 2 * tm * dim_p * cbytes             # x tile, double-buffered
    est += 2 * tm * dim_p * obytes             # out tile, double-buffered
    est += tm * dim_p * 4                      # f32 accumulator scratch
    est += 2 * tm * th * 4                     # f32 GELU intermediate + temps
    est += 2 * 2 * (th + dim_p) * 4            # biases
    vmem_limit = int(min(64 * 1024 * 1024, max(2 * est, 8 * 1024 * 1024)))

    grid = (num_i, num_k)

    out2d = pl.pallas_call(
        _ff_kernel,
        out_shape=jax.ShapeDtypeStruct((rows_p, dim_p), out_dtype),
        grid_spec=pltpu.PrefetchScalarGridSpec(
            num_scalar_prefetch=0,
            grid=grid,
            in_specs=[
                pl.BlockSpec((tm, dim_p), lambda i, k: (i, 0)),    # x tile
                pl.BlockSpec((dim_p, th), lambda i, k: (0, k)),    # W1 chunk
                pl.BlockSpec((1, th), lambda i, k: (0, k)),        # b1 chunk
                pl.BlockSpec((th, dim_p), lambda i, k: (k, 0)),    # W2 chunk
                pl.BlockSpec((1, dim_p), lambda i, k: (0, 0)),     # b2
            ],
            out_specs=pl.BlockSpec((tm, dim_p), lambda i, k: (i, 0)),
            scratch_shapes=[pltpu.VMEM((tm, dim_p), jnp.float32)],
        ),
        compiler_params=pltpu.CompilerParams(
            dimension_semantics=("parallel", "arbitrary"),
            vmem_limit_bytes=vmem_limit,
        ),
    )(x2d, w1_p, b1_p, w2_p, b2_p)

    return out2d[:rows, :dim].reshape(batch, seq, dim)


def feed_forward_ref(x, w1, b1, w2, b2):
    """Pure-JAX f32 reference (exact-erf GELU, same math as nn.GELU())."""
    h = jnp.dot(x, w1) + b1
    h = 0.5 * h * (1.0 + jax.lax.erf(h * _INV_SQRT2))
    return jnp.dot(h, w2) + b2


if __name__ == "__main__":
    # Small shapes consistent with a mixer FeedForward on token embeddings.
    batch, seq, dim, hidden = 2, 8, 32, 64

    key = jax.random.PRNGKey(0)
    kx, kw1, kb1, kw2, kb2 = jax.random.split(key, 5)

    x = jax.random.normal(kx, (batch, seq, dim), dtype=jnp.float32)

    # Deterministic parameter init (torch.nn.Linear-style uniform bounds).
    bound1 = 1.0 / math.sqrt(dim)
    w1 = jax.random.uniform(kw1, (dim, hidden), jnp.float32, -bound1, bound1)
    b1 = jax.random.uniform(kb1, (hidden,), jnp.float32, -bound1, bound1)
    bound2 = 1.0 / math.sqrt(hidden)
    w2 = jax.random.uniform(kw2, (hidden, dim), jnp.float32, -bound2, bound2)
    b2 = jax.random.uniform(kb2, (dim,), jnp.float32, -bound2, bound2)

    ref = feed_forward_ref(x, w1, b1, w2, b2)

    # f32 compute path: must match the exact-GELU reference tightly.
    out_f32 = feed_forward(x, w1, b1, w2, b2, compute_dtype=jnp.float32)
    out_f32 = jax.block_until_ready(out_f32)
    assert out_f32.shape == (batch, seq, dim)
    assert jnp.allclose(out_f32, ref, atol=2e-5, rtol=2e-5), "f32 mismatch vs reference"

    # Default (bf16 matmul operands) path: looser tolerance vs the f32 reference.
    out_bf16 = feed_forward(x, w1, b1, w2, b2)
    out_bf16 = jax.block_until_ready(out_bf16)
    assert out_bf16.shape == (batch, seq, dim)
    assert jnp.allclose(out_bf16, ref, atol=5e-2, rtol=5e-2), "bf16 mismatch vs reference"

    print("KERNEL_OK")
</pallas_src>

<mosaic_0001>
module attributes {stable_mosaic.version = 11 : i64} {
  func.func @_ff_kernel(%arg0: i32, %arg1: i32, %arg2: memref<16x128xf32, #tpu.memory_space<vmem>>, %arg3: memref<128x128xf32, #tpu.memory_space<vmem>>, %arg4: memref<1x128xf32, #tpu.memory_space<vmem>>, %arg5: memref<128x128xf32, #tpu.memory_space<vmem>>, %arg6: memref<1x128xf32, #tpu.memory_space<vmem>>, %arg7: memref<16x128xf32, #tpu.memory_space<vmem>>, %arg8: memref<16x128xf32, #tpu.memory_space<vmem>>) attributes {dimension_semantics = [#tpu.dimension_semantics<parallel>, #tpu.dimension_semantics<arbitrary>], iteration_bounds = array<i64: 1, 1>, scalar_prefetch = 0 : i64, scratch_operands = 1 : i64, tpu.core_type = #tpu.core_type<tc>, window_params = [{transform_indices = @transform_0, window_bounds = array<i64: 16, 128>}, {transform_indices = @transform_1, window_bounds = array<i64: 128, 128>}, {transform_indices = @transform_2, window_bounds = array<i64: 1, 128>}, {transform_indices = @transform_3, window_bounds = array<i64: 128, 128>}, {pipeline_mode = #tpu.pipeline_mode<synchronous>, transform_indices = @transform_4, window_bounds = array<i64: 1, 128>}, {transform_indices = @transform_5, window_bounds = array<i64: 16, 128>}]} {
    %c0_i32 = arith.constant 0 : i32
    %0 = arith.cmpi eq, %arg1, %c0_i32 : i32
    %1 = arith.extui %0 : i1 to i32
    %c0_i32_0 = arith.constant 0 : i32
    %2 = arith.cmpi ne, %1, %c0_i32_0 : i32
    scf.if %2 {
      %cst_30 = arith.constant 0.000000e+00 : f32
      %57 = vector.broadcast %cst_30 : f32 to vector<16x128xf32>
      %c0_31 = arith.constant 0 : index
      %c0_32 = arith.constant 0 : index
      %58 = vector.load %arg8[%c0_31, %c0_32] : memref<16x128xf32, #tpu.memory_space<vmem>>, vector<16x128xf32>
      tpu.vector_store %arg8[%c0_31, %c0_32], %57 {strides = array<i32>} : memref<16x128xf32, #tpu.memory_space<vmem>>, vector<16x128xf32>,
    } else {
    }
    %c0 = arith.constant 0 : index
    %c0_1 = arith.constant 0 : index
    %3 = vector.load %arg2[%c0, %c0_1] : memref<16x128xf32, #tpu.memory_space<vmem>>, vector<16x128xf32>
    %c0_2 = arith.constant 0 : index
    %c0_3 = arith.constant 0 : index
    %4 = vector.load %arg3[%c0_2, %c0_3] : memref<128x128xf32, #tpu.memory_space<vmem>>, vector<128x128xf32>
    %cst = arith.constant dense<0.000000e+00> : vector<16x128xf32>
    %5 = tpu.matmul %3, %4, %cst {dimension_numbers = #tpu.dot_dimension_numbers<[1], [0], [0], [1], [0, 0, 1, 1], [], []>} : vector<16x128xf32>, vector<128x128xf32>, vector<16x128xf32> -> vector<16x128xf32>
    %c0_4 = arith.constant 0 : index
    %c0_5 = arith.constant 0 : index
    %6 = vector.load %arg4[%c0_4, %c0_5] : memref<1x128xf32, #tpu.memory_space<vmem>>, vector<1x128xf32>
    %7 = vector.broadcast %6 : vector<1x128xf32> to vector<16x128xf32>
    %8 = arith.addf %5, %7 : vector<16x128xf32>
    %cst_6 = arith.constant 5.000000e-01 : f32
    %9 = vector.broadcast %cst_6 : f32 to vector<16x128xf32>
    %10 = arith.mulf %9, %8 : vector<16x128xf32>
    %cst_7 = arith.constant 0.707106769 : f32
    %11 = vector.broadcast %cst_7 : f32 to vector<16x128xf32>
    %12 = arith.mulf %8, %11 : vector<16x128xf32>
    %13 = math.absf %12 : vector<16x128xf32>
    %cst_8 = arith.constant 0.327591091 : f32
    %14 = vector.broadcast %cst_8 : f32 to vector<16x128xf32>
    %15 = arith.mulf %14, %13 : vector<16x128xf32>
    %cst_9 = arith.constant 1.000000e+00 : f32
    %16 = vector.broadcast %cst_9 : f32 to vector<16x128xf32>
    %17 = arith.addf %16, %15 : vector<16x128xf32>
    %cst_10 = arith.constant 1.000000e+00 : f32
    %18 = vector.broadcast %cst_10 : f32 to vector<16x128xf32>
    %19 = arith.divf %18, %17 : vector<16x128xf32>
    %cst_11 = arith.constant 1.06140542 : f32
    %20 = vector.broadcast %cst_11 : f32 to vector<16x128xf32>
    %21 = arith.mulf %19, %20 : vector<16x128xf32>
    %cst_12 = arith.constant -1.45315206 : f32
    %22 = vector.broadcast %cst_12 : f32 to vector<16x128xf32>
    %23 = arith.addf %22, %21 : vector<16x128xf32>
    %24 = arith.mulf %19, %23 : vector<16x128xf32>
    %cst_13 = arith.constant 1.42141378 : f32
    %25 = vector.broadcast %cst_13 : f32 to vector<16x128xf32>
    %26 = arith.addf %25, %24 : vector<16x128xf32>
    %27 = arith.mulf %19, %26 : vector<16x128xf32>
    %cst_14 = arith.constant -0.284496725 : f32
    %28 = vector.broadcast %cst_14 : f32 to vector<16x128xf32>
    %29 = arith.addf %28, %27 : vector<16x128xf32>
    %30 = arith.mulf %19, %29 : vector<16x128xf32>
    %cst_15 = arith.constant 0.254829586 : f32
    %31 = vector.broadcast %cst_15 : f32 to vector<16x128xf32>
    %32 = arith.addf %31, %30 : vector<16x128xf32>
    %33 = arith.mulf %19, %32 : vector<16x128xf32>
    %cst_16 = arith.constant 0.000000e+00 : f32
    %34 = vector.broadcast %cst_16 : f32 to vector<16x128xf32>
    %35 = arith.subf %34, %13 : vector<16x128xf32>
    %36 = arith.mulf %35, %13 : vector<16x128xf32>
    %37 = math.exp %36 : vector<16x128xf32>
    %38 = arith.mulf %33, %37 : vector<16x128xf32>
    %cst_17 = arith.constant 1.000000e+00 : f32
    %39 = vector.broadcast %cst_17 : f32 to vector<16x128xf32>
    %40 = arith.subf %39, %38 : vector<16x128xf32>
    %cst_18 = arith.constant 0.000000e+00 : f32
    %41 = vector.broadcast %cst_18 : f32 to vector<16x128xf32>
    %42 = arith.cmpf oge, %12, %41 : vector<16x128xf32>
    %cst_19 = arith.constant 0.000000e+00 : f32
    %43 = vector.broadcast %cst_19 : f32 to vector<16x128xf32>
    %44 = arith.subf %43, %40 : vector<16x128xf32>
    %45 = arith.select %42, %40, %44 : vector<16x128xi1>, vector<16x128xf32>
    %cst_20 = arith.constant 1.000000e+00 : f32
    %46 = vector.broadcast %cst_20 : f32 to vector<16x128xf32>
    %47 = arith.addf %46, %45 : vector<16x128xf32>
    %48 = arith.mulf %10, %47 : vector<16x128xf32>
    %c0_21 = arith.constant 0 : index
    %c0_22 = arith.constant 0 : index
    %49 = vector.load %arg8[%c0_21, %c0_22] : memref<16x128xf32, #tpu.memory_space<vmem>>, vector<16x128xf32>
    %c0_23 = arith.constant 0 : index
    %c0_24 = arith.constant 0 : index
    %50 = vector.load %arg5[%c0_23, %c0_24] : memref<128x128xf32, #tpu.memory_space<vmem>>, vector<128x128xf32>
    %cst_25 = arith.constant dense<0.000000e+00> : vector<16x128xf32>
    %51 = tpu.matmul %48, %50, %cst_25 {dimension_numbers = #tpu.dot_dimension_numbers<[1], [0], [0], [1], [0, 0, 1, 1], [], []>} : vector<16x128xf32>, vector<128x128xf32>, vector<16x128xf32> -> vector<16x128xf32>
    %52 = arith.addf %49, %51 : vector<16x128xf32>
    %c0_26 = arith.constant 0 : index
    %c0_27 = arith.constant 0 : index
    %53 = vector.load %arg8[%c0_26, %c0_27] : memref<16x128xf32, #tpu.memory_space<vmem>>, vector<16x128xf32>
    tpu.vector_store %arg8[%c0_26, %c0_27], %52 {strides = array<i32>} : memref<16x128xf32, #tpu.memory_space<vmem>>, vector<16x128xf32>,
    %c0_i32_28 = arith.constant 0 : i32
    %54 = arith.cmpi eq, %arg1, %c0_i32_28 : i32
    %55 = arith.extui %54 : i1 to i32
    %c0_i32_29 = arith.constant 0 : i32
    %56 = arith.cmpi ne, %55, %c0_i32_29 : i32
    scf.if %56 {
      %c0_30 = arith.constant 0 : index
      %c0_31 = arith.constant 0 : index
      %57 = vector.load %arg8[%c0_30, %c0_31] : memref<16x128xf32, #tpu.memory_space<vmem>>, vector<16x128xf32>
      %c0_32 = arith.constant 0 : index
      %c0_33 = arith.constant 0 : index
      %58 = vector.load %arg6[%c0_32, %c0_33] : memref<1x128xf32, #tpu.memory_space<vmem>>, vector<1x128xf32>
      %59 = vector.broadcast %58 : vector<1x128xf32> to vector<16x128xf32>
      %60 = arith.addf %57, %59 : vector<16x128xf32>
      %c0_34 = arith.constant 0 : index
      %c0_35 = arith.constant 0 : index
      %61 = vector.load %arg7[%c0_34, %c0_35] : memref<16x128xf32, #tpu.memory_space<vmem>>, vector<16x128xf32>
      tpu.vector_store %arg7[%c0_34, %c0_35], %60 {strides = array<i32>} : memref<16x128xf32, #tpu.memory_space<vmem>>, vector<16x128xf32>,
    } else {
    }
    return
  }
  func.func @transform_0(%arg0: i32, %arg1: i32) -> (i32, i32) {
    %c0_i32 = arith.constant 0 : i32
    %c0_i32_0 = arith.constant 0 : i32
    return %arg0, %c0_i32 : i32, i32
  }
  func.func @transform_1(%arg0: i32, %arg1: i32) -> (i32, i32) {
    %c0_i32 = arith.constant 0 : i32
    %c0_i32_0 = arith.constant 0 : i32
    return %c0_i32, %arg1 : i32, i32
  }
  func.func @transform_2(%arg0: i32, %arg1: i32) -> (i32, i32) {
    %c0_i32 = arith.constant 0 : i32
    %c0_i32_0 = arith.constant 0 : i32
    return %c0_i32, %arg1 : i32, i32
  }
  func.func @transform_3(%arg0: i32, %arg1: i32) -> (i32, i32) {
    %c0_i32 = arith.constant 0 : i32
    %c0_i32_0 = arith.constant 0 : i32
    return %arg1, %c0_i32 : i32, i32
  }
  func.func @transform_4(%arg0: i32, %arg1: i32) -> (i32, i32) {
    %c0_i32 = arith.constant 0 : i32
    %c0_i32_0 = arith.constant 0 : i32
    %c0_i32_1 = arith.constant 0 : i32
    return %c0_i32, %c0_i32_0 : i32, i32
  }
  func.func @transform_5(%arg0: i32, %arg1: i32) -> (i32, i32) {
    %c0_i32 = arith.constant 0 : i32
    %c0_i32_0 = arith.constant 0 : i32
    return %arg0, %c0_i32 : i32, i32
  }
}

</mosaic_0001>

<llo_original>
// kernel: tpu_custom_call.1
$region0: #{tpu_custom_call.1}
  #allocation0 [shape = 'u32[]', space=smem, size = 0x4, offset = 0x4, fixed_abs, tag = 'smem constant byte address 0x4 - core index']
  #allocation1 [shape = 'u32[144,128]{1,0:T(1,128)}', space=vmem, size = 0x12000, scoped, tag = 'internal scratch']
  #allocation2 [shape = 'f32[16,128]{1,0:T(8,128)}', space=vmem, size = 0x2000, scoped, tag = 'scratch operand']
  %s0 = inlined_call_operand.hbm [shape: f32[16,128], index: 0, kind: input, shape index: {}]
  %s1 = inlined_call_operand.hbm [shape: f32[128,128], index: 1, kind: input, shape index: {}]
  %s2 = inlined_call_operand.vmem [shape: f32[1,128], index: 2, kind: input, shape index: {}]
  %s3 = inlined_call_operand.hbm [shape: f32[128,128], index: 3, kind: input, shape index: {}]
  %s4 = inlined_call_operand.vmem [shape: f32[1,128], index: 4, kind: input, shape index: {}]
  %s5 = inlined_call_operand.hbm [shape: f32[16,128], index: 5, kind: output, shape index: {}]
  %s6 = sld [smem:[#allocation0]]
  $region50: #{tpu_custom_call.1} parent=0
    _
  %s8 = ssub.s32 1, %s6
  %s9 = scalar_select 0, %s8, %s6
  $region1: #{tpu_custom_call.1} parent=0
    #allocation3 [shape = 'u8[8192]{0}', space=vmem, size = 0x2000, scoped, tag = 'input window, operand 0, single buffered']
    #allocation4 [shape = 's32[1]{0}', space=sflag, size = 0x4, scoped, tag = 'scoped memory for tpu_custom_call.1']
    #allocation5 [shape = 's32[1]{0}', space=sflag, size = 0x4, scoped, tag = 'scoped memory for tpu_custom_call.1']
    #allocation6 [shape = 'u8[65536]{0}', space=vmem, size = 0x10000, scoped, tag = 'input window, operand 1, single buffered']
    #allocation7 [shape = 's32[1]{0}', space=sflag, size = 0x4, scoped, tag = 'scoped memory for tpu_custom_call.1']
    #allocation8 [shape = 'u8[65536]{0}', space=vmem, size = 0x10000, scoped, tag = 'input window, operand 3, single buffered']
    #allocation9 [shape = 'u8[8192]{0}', space=vmem, size = 0x2000, scoped, tag = 'output window, operand 0, single buffered']
    %10 = vsyncpa [#allocation4], 0
    %11 = vsyncpa [#allocation7], 0
    %12 = vsyncpa [#allocation5], 0
    // Predicated region
    $region2: #{tpu_custom_call.1} parent=1 // pred_check
      _
    $region3: #{tpu_custom_call.1} parent=1 // pred_check_branch
      %14 = sbr.rel (0) target = $region5
    $region4: #{tpu_custom_call.1} parent=1 // pred_region
      %s16 = ssub.s32 256, 256
      %17 = vsyncadd [#allocation4], %s16
      %s18 = sshll.u32 [#allocation3], 4
      %s19 = int_to_ptr.vmem [resolvable:$true] %s18
      %24 = dma.hbm_to_vmem [thread:$0]  %s0, 256, %s19, [#allocation4], 128, 128, 8
    $region5: #{tpu_custom_call.1} parent=1 // pred_fallthru
      _
    // Predicated region
    $region6: #{tpu_custom_call.1} parent=1 // pred_check
      _
    $region7: #{tpu_custom_call.1} parent=1 // pred_check_branch
      %26 = sbr.rel (0) target = $region9
    $region8: #{tpu_custom_call.1} parent=1 // pred_region
      %s28 = ssub.s32 2048, 2048
      %29 = vsyncadd [#allocation7], %s28
      %s30 = sshll.u32 [#allocation6], 4
      %s31 = int_to_ptr.vmem [resolvable:$true] %s30
      %36 = dma.hbm_to_vmem [thread:$0]  %s1, 2048, %s31, [#allocation7], 128, 128, 8
    $region9: #{tpu_custom_call.1} parent=1 // pred_fallthru
      _
    // Predicated region
    $region10: #{tpu_custom_call.1} parent=1 // pred_check
      _
    $region11: #{tpu_custom_call.1} parent=1 // pred_check_branch
      %38 = sbr.rel (0) target = $region13
    $region12: #{tpu_custom_call.1} parent=1 // pred_region
      _
    $region13: #{tpu_custom_call.1} parent=1 // pred_fallthru
      _
    // Predicated region
    $region14: #{tpu_custom_call.1} parent=1 // pred_check
      _
    $region15: #{tpu_custom_call.1} parent=1 // pred_check_branch
      %40 = sbr.rel (0) target = $region17
    $region16: #{tpu_custom_call.1} parent=1 // pred_region
      %s42 = ssub.s32 2048, 2048
      %43 = vsyncadd [#allocation7], %s42
      %s44 = sshll.u32 [#allocation8], 4
      %s45 = int_to_ptr.vmem [resolvable:$true] %s44
      %50 = dma.hbm_to_vmem [thread:$0]  %s3, 2048, %s45, [#allocation7], 128, 128, 8
    $region17: #{tpu_custom_call.1} parent=1 // pred_fallthru
      _
    // Predicated region
    $region18: #{tpu_custom_call.1} parent=1 // pred_check
      _
    $region19: #{tpu_custom_call.1} parent=1 // pred_check_branch
      %52 = sbr.rel (0) target = $region21
    $region20: #{tpu_custom_call.1} parent=1 // pred_region
      _
    $region21: #{tpu_custom_call.1} parent=1 // pred_fallthru
      _
    // Predicated region
    $region22: #{tpu_custom_call.1} parent=1 // pred_check
      _
    $region23: #{tpu_custom_call.1} parent=1 // pred_check_branch
      %54 = sbr.rel (0) target = $region25
    $region24: #{tpu_custom_call.1} parent=1 // pred_region
      %55 = dma.done [#allocation4], 256
    $region25: #{tpu_custom_call.1} parent=1 // pred_fallthru
      _
    // Predicated region
    $region26: #{tpu_custom_call.1} parent=1 // pred_check
      _
    $region27: #{tpu_custom_call.1} parent=1 // pred_check_branch
      %57 = sbr.rel (0) target = $region29
    $region28: #{tpu_custom_call.1} parent=1 // pred_region
      %58 = dma.done [#allocation7], 2048
    $region29: #{tpu_custom_call.1} parent=1 // pred_fallthru
      _
    // Predicated region
    $region30: #{tpu_custom_call.1} parent=1 // pred_check
      _
    $region31: #{tpu_custom_call.1} parent=1 // pred_check_branch
      %60 = sbr.rel (0) target = $region33
    $region32: #{tpu_custom_call.1} parent=1 // pred_region
      %61 = dma.done [#allocation7], 2048
    $region33: #{tpu_custom_call.1} parent=1 // pred_fallthru
      _
    %p62 = scmp.eq.s32.totalorder 0, 0
    // Predicated region
    $region34: #{tpu_custom_call.1} parent=1 // pred_check
      %p63 = pneg %p62
    $region35: #{tpu_custom_call.1} parent=1 // pred_check_branch
      %65 = sbr.rel (%p63) target = $region37
    $region36: #{tpu_custom_call.1} parent=1 // pred_region
      %66 = vst [vmem:[#allocation2] sm:$0xff] 0.0
      %67 = vst [vmem:[#allocation2 + $0x8] sm:$0xff] 0.0
    $region37: #{tpu_custom_call.1} parent=1 // pred_fallthru
      _
    %v68 = vld [vmem:[#allocation3] sm:$0xff]
    %v69 = vld [vmem:[#allocation3 + $0x8] sm:$0xff]
    %v70 = vld [vmem:[#allocation6] sm:$0xff]
    %v71 = vld [vmem:[#allocation6 + $0x8] sm:$0xff]
    %v72 = vld [vmem:[#allocation6 + $0x10] sm:$0xff]
    %v73 = vld [vmem:[#allocation6 + $0x18] sm:$0xff]
    %v74 = vld [vmem:[#allocation6 + $0x20] sm:$0xff]
    %v75 = vld [vmem:[#allocation6 + $0x28] sm:$0xff]
    %v76 = vld [vmem:[#allocation6 + $0x30] sm:$0xff]
    %v77 = vld [vmem:[#allocation6 + $0x38] sm:$0xff]
    %v78 = vld [vmem:[#allocation6 + $0x40] sm:$0xff]
    %v79 = vld [vmem:[#allocation6 + $0x48] sm:$0xff]
    %v80 = vld [vmem:[#allocation6 + $0x50] sm:$0xff]
    %v81 = vld [vmem:[#allocation6 + $0x58] sm:$0xff]
    %v82 = vld [vmem:[#allocation6 + $0x60] sm:$0xff]
    %v83 = vld [vmem:[#allocation6 + $0x68] sm:$0xff]
    %v84 = vld [vmem:[#allocation6 + $0x70] sm:$0xff]
    %v85 = vld [vmem:[#allocation6 + $0x78] sm:$0xff]
    %v86 = vld [vmem:[%s2] sm:$0x1]
    %v88 = vlaneseq
    %v89 = vshrl.u32 %v88, 7
    %v90 = vsub.s32 0, %v89
    %v91 = vrot.slane %v86, %v90
    %93 = vmatprep.subr.mxu0 0.0
    %94 = vmatpush1.msra.mxu0 %v85
    %95 = vmatprep.subr.mxu0 0.0
    %96 = vmatpush1.msra.mxu0 %v84
    %97 = vmatprep.subr.mxu0 0.0
    %98 = vmatpush1.msra.mxu0 %v83
    %99 = vmatprep.subr.mxu0 0.0
    %100 = vmatpush1.msra.mxu0 %v82
    %101 = vmatprep.subr.mxu0 0.0
    %102 = vmatpush1.msra.mxu0 %v81
    %103 = vmatprep.subr.mxu0 0.0
    %104 = vmatpush1.msra.mxu0 %v80
    %105 = vmatprep.subr.mxu0 0.0
    %106 = vmatpush1.msra.mxu0 %v79
    %107 = vmatprep.subr.mxu0 0.0
    %108 = vmatpush1.msra.mxu0 %v78
    %109 = vmatprep.subr.mxu0 0.0
    %110 = vmatpush1.msra.mxu0 %v77
    %111 = vmatprep.subr.mxu0 0.0
    %112 = vmatpush1.msra.mxu0 %v76
    %113 = vmatprep.subr.mxu0 0.0
    %114 = vmatpush1.msra.mxu0 %v75
    %115 = vmatprep.subr.mxu0 0.0
    %116 = vmatpush1.msra.mxu0 %v74
    %117 = vmatprep.subr.mxu0 0.0
    %118 = vmatpush1.msra.mxu0 %v73
    %119 = vmatprep.subr.mxu0 0.0
    %120 = vmatpush1.msra.mxu0 %v72
    %121 = vmatprep.subr.mxu0 0.0
    %122 = vmatpush1.msra.mxu0 %v71
    %123 = vmatprep.subr.mxu0 0.0
    %124 = vmatpush1.msra.mxu0 %v70
    %125 = vmatprep.subr.mxu0 0.0
    %126 = vmatpush2.msra.mxu0 0.0
    %127 = vmatprep.subr.mxu0 0.0
    %128 = vmatpush2.msra.mxu0 0.0
    %129 = vmatprep.subr.mxu0 0.0
    %130 = vmatpush2.msra.mxu0 0.0
    %131 = vmatprep.subr.mxu0 0.0
    %132 = vmatpush2.msra.mxu0 0.0
    %133 = vmatprep.subr.mxu0 0.0
    %134 = vmatpush2.msra.mxu0 0.0
    %135 = vmatprep.subr.mxu0 0.0
    %136 = vmatpush2.msra.mxu0 0.0
    %137 = vmatprep.subr.mxu0 0.0
    %138 = vmatpush2.msra.mxu0 0.0
    %139 = vmatprep.subr.mxu0 0.0
    %140 = vmatpush2.msra.mxu0 0.0
    %141 = vmatprep.subr.mxu0 0.0
    %142 = vmatpush2.msra.mxu0 0.0
    %143 = vmatprep.subr.mxu0 0.0
    %144 = vmatpush2.msra.mxu0 0.0
    %145 = vmatprep.subr.mxu0 0.0
    %146 = vmatpush2.msra.mxu0 0.0
    %147 = vmatprep.subr.mxu0 0.0
    %148 = vmatpush2.msra.mxu0 0.0
    %149 = vmatprep.subr.mxu0 0.0
    %150 = vmatpush2.msra.mxu0 0.0
    %151 = vmatprep.subr.mxu0 0.0
    %152 = vmatpush2.msra.mxu0 0.0
    %153 = vmatprep.subr.mxu0 0.0
    %154 = vmatpush2.msra.mxu0 0.0
    %155 = vmatprep.subr.mxu0 0.0
    %156 = vmatpush2.msra.mxu0 0.0
    %157 = vmatprep.mubr.f32.mxu0 0.0
    %158 = vmatmul.mubr.f32.gmra.mxu0 %v68
    %v159 = vpop.f32.mrf.mxu0
    %v160 = vadd.f32 %v91, %v159
    %v161 = vpop.f32.mrf.mxu0
    %162 = vmatprep.mubr.f32.mxu0 0.0
    %163 = vmatmul.mubr.f32.gmra.mxu0 %v69
    %v164 = vpop.f32.mrf.mxu0
    %v165 = vadd.f32 %v91, %v164
    %v166 = vpop.f32.mrf.mxu0
    %167 = vdwg.mxu0
    %v168 = vmul.f32 %v160, 0.5
    %v169 = vmul.f32 %v165, 0.5
    %v170 = vmul.f32 %v160, 0.70710677
    %v171 = vmul.f32 %v165, 0.70710677
    %v172 = vand.u32 2147483647, %v170
    %v173 = vand.u32 2147483647, %v171
    %v174 = vmul.f32 %v172, 0.3275911
    %v175 = vmul.f32 %v173, 0.3275911
    %v176 = vadd.f32 %v174, 1.0
    %v177 = vadd.f32 %v175, 1.0
    %v178 = vrcp.pop %v176
    %v179 = vmul.f32 1.0, %v178
    %v180 = vrcp.pop %v177
    %v181 = vmul.f32 1.0, %v180
    %v182 = vmul.f32 %v179, 1.0614054
    %v183 = vmul.f32 %v181, 1.0614054
    %v184 = vadd.f32 %v182, -1.4531521
    %v185 = vadd.f32 %v183, -1.4531521
    %v186 = vmul.f32 %v179, %v184
    %v187 = vmul.f32 %v181, %v185
    %v188 = vadd.f32 %v186, 1.4214138
    %v189 = vadd.f32 %v187, 1.4214138
    %v190 = vmul.f32 %v179, %v188
    %v191 = vmul.f32 %v181, %v189
    %v192 = vadd.f32 %v190, -0.28449672
    %v193 = vadd.f32 %v191, -0.28449672
    %v194 = vmul.f32 %v179, %v192
    %v195 = vmul.f32 %v181, %v193
    %v196 = vadd.f32 %v194, 0.2548296
    %v197 = vadd.f32 %v195, 0.2548296
    %v198 = vmul.f32 %v179, %v196
    %v199 = vmul.f32 %v181, %v197
    %v200 = vsub.f32 0.0, %v172
    %v201 = vsub.f32 0.0, %v173
    %v202 = vmul.f32 %v200, %v172
    %v203 = vmul.f32 %v201, %v173
    %v204 = vmul.f32 %v202, 1.442695
    %v205 = vpow.pop %v204
    %v206 = vmul.f32 %v203, 1.442695
    %v207 = vpow.pop %v206
    %v208 = vmul.f32 %v198, %v205
    %v209 = vmul.f32 %v199, %v207
    %v210 = vsub.f32 1.0, %v208
    %v211 = vsub.f32 1.0, %v209
    %vm212 = vcmp.ge.f32.partialorder %v170, 0.0
    %vm213 = vcmp.ge.f32.partialorder %v171, 0.0
    %v214 = vsub.f32 0.0, %v210
    %v215 = vsub.f32 0.0, %v211
    %v216 = vsel %vm212, %v210, %v214
    %v217 = vsel %vm213, %v211, %v215
    %v218 = vadd.f32 %v216, 1.0
    %v219 = vadd.f32 %v217, 1.0
    %v220 = vmul.f32 %v168, %v218
    %v221 = vmul.f32 %v169, %v219
    %v222 = vld [vmem:[#allocation2] sm:$0xff]
    %v223 = vld [vmem:[#allocation2 + $0x8] sm:$0xff]
    %v224 = vld [vmem:[#allocation8] sm:$0xff]
    %v225 = vld [vmem:[#allocation8 + $0x8] sm:$0xff]
    %v226 = vld [vmem:[#allocation8 + $0x10] sm:$0xff]
    %v227 = vld [vmem:[#allocation8 + $0x18] sm:$0xff]
    %v228 = vld [vmem:[#allocation8 + $0x20] sm:$0xff]
    %v229 = vld [vmem:[#allocation8 + $0x28] sm:$0xff]
    %v230 = vld [vmem:[#allocation8 + $0x30] sm:$0xff]
    %v231 = vld [vmem:[#allocation8 + $0x38] sm:$0xff]
    %v232 = vld [vmem:[#allocation8 + $0x40] sm:$0xff]
    %v233 = vld [vmem:[#allocation8 + $0x48] sm:$0xff]
    %v234 = vld [vmem:[#allocation8 + $0x50] sm:$0xff]
    %v235 = vld [vmem:[#allocation8 + $0x58] sm:$0xff]
    %v236 = vld [vmem:[#allocation8 + $0x60] sm:$0xff]
    %v237 = vld [vmem:[#allocation8 + $0x68] sm:$0xff]
    %v238 = vld [vmem:[#allocation8 + $0x70] sm:$0xff]
    %v239 = vld [vmem:[#allocation8 + $0x78] sm:$0xff]
    %240 = vmatprep.subr.mxu0 0.0
    %241 = vmatpush1.msra.mxu0 %v239
    %242 = vmatprep.subr.mxu0 0.0
    %243 = vmatpush1.msra.mxu0 %v238
    %244 = vmatprep.subr.mxu0 0.0
    %245 = vmatpush1.msra.mxu0 %v237
    %246 = vmatprep.subr.mxu0 0.0
    %247 = vmatpush1.msra.mxu0 %v236
    %248 = vmatprep.subr.mxu0 0.0
    %249 = vmatpush1.msra.mxu0 %v235
    %250 = vmatprep.subr.mxu0 0.0
    %251 = vmatpush1.msra.mxu0 %v234
    %252 = vmatprep.subr.mxu0 0.0
    %253 = vmatpush1.msra.mxu0 %v233
    %254 = vmatprep.subr.mxu0 0.0
    %255 = vmatpush1.msra.mxu0 %v232
    %256 = vmatprep.subr.mxu0 0.0
    %257 = vmatpush1.msra.mxu0 %v231
    %258 = vmatprep.subr.mxu0 0.0
    %259 = vmatpush1.msra.mxu0 %v230
    %260 = vmatprep.subr.mxu0 0.0
    %261 = vmatpush1.msra.mxu0 %v229
    %262 = vmatprep.subr.mxu0 0.0
    %263 = vmatpush1.msra.mxu0 %v228
    %264 = vmatprep.subr.mxu0 0.0
    %265 = vmatpush1.msra.mxu0 %v227
    %266 = vmatprep.subr.mxu0 0.0
    %267 = vmatpush1.msra.mxu0 %v226
    %268 = vmatprep.subr.mxu0 0.0
    %269 = vmatpush1.msra.mxu0 %v225
    %270 = vmatprep.subr.mxu0 0.0
    %271 = vmatpush1.msra.mxu0 %v224
    %272 = vmatprep.subr.mxu0 0.0
    %273 = vmatpush2.msra.mxu0 0.0
    %274 = vmatprep.subr.mxu0 0.0
    %275 = vmatpush2.msra.mxu0 0.0
    %276 = vmatprep.subr.mxu0 0.0
    %277 = vmatpush2.msra.mxu0 0.0
    %278 = vmatprep.subr.mxu0 0.0
    %279 = vmatpush2.msra.mxu0 0.0
    %280 = vmatprep.subr.mxu0 0.0
    %281 = vmatpush2.msra.mxu0 0.0
    %282 = vmatprep.subr.mxu0 0.0
    %283 = vmatpush2.msra.mxu0 0.0
    %284 = vmatprep.subr.mxu0 0.0
    %285 = vmatpush2.msra.mxu0 0.0
    %286 = vmatprep.subr.mxu0 0.0
    %287 = vmatpush2.msra.mxu0 0.0
    %288 = vmatprep.subr.mxu0 0.0
    %289 = vmatpush2.msra.mxu0 0.0
    %290 = vmatprep.subr.mxu0 0.0
    %291 = vmatpush2.msra.mxu0 0.0
    %292 = vmatprep.subr.mxu0 0.0
    %293 = vmatpush2.msra.mxu0 0.0
    %294 = vmatprep.subr.mxu0 0.0
    %295 = vmatpush2.msra.mxu0 0.0
    %296 = vmatprep.subr.mxu0 0.0
    %297 = vmatpush2.msra.mxu0 0.0
    %298 = vmatprep.subr.mxu0 0.0
    %299 = vmatpush2.msra.mxu0 0.0
    %300 = vmatprep.subr.mxu0 0.0
    %301 = vmatpush2.msra.mxu0 0.0
    %302 = vmatprep.subr.mxu0 0.0
    %303 = vmatpush2.msra.mxu0 0.0
    %304 = vmatprep.mubr.f32.mxu0 0.0
    %305 = vmatmul.mubr.f32.gmra.mxu0 %v220
    %v306 = vpop.f32.mrf.mxu0
    %v307 = vadd.f32 0.0, %v306
    %v308 = vpop.f32.mrf.mxu0
    %309 = vmatprep.mubr.f32.mxu0 0.0
    %310 = vmatmul.mubr.f32.gmra.mxu0 %v221
    %v311 = vpop.f32.mrf.mxu0
    %v312 = vadd.f32 0.0, %v311
    %v313 = vpop.f32.mrf.mxu0
    %314 = vdwg.mxu0
    %v315 = vadd.f32 %v222, %v307
    %v316 = vadd.f32 %v223, %v312
    %317 = vst [vmem:[#allocation2] sm:$0xff] %v315
    %318 = vst [vmem:[#allocation2 + $0x8] sm:$0xff] %v316
    // Predicated region
    $region38: #{tpu_custom_call.1} parent=1 // pred_check
      %p319 = pneg %p62
    $region39: #{tpu_custom_call.1} parent=1 // pred_check_branch
      %321 = sbr.rel (%p319) target = $region41
    $region40: #{tpu_custom_call.1} parent=1 // pred_region
      %v322 = vld [vmem:[#allocation2] sm:$0xff]
      %v323 = vld [vmem:[#allocation2 + $0x8] sm:$0xff]
      %v324 = vld [vmem:[%s4] sm:$0x1]
      %v326 = vlaneseq
      %v327 = vshrl.u32 %v326, 7
      %v328 = vsub.s32 0, %v327
      %v329 = vrot.slane %v324, %v328
      %v331 = vadd.f32 %v322, %v329
      %v332 = vadd.f32 %v323, %v329
      %333 = vst [vmem:[#allocation9] sm:$0xff] %v331
      %334 = vst [vmem:[#allocation9 + $0x8] sm:$0xff] %v332
    $region41: #{tpu_custom_call.1} parent=1 // pred_fallthru
      _
    // Predicated region
    $region42: #{tpu_custom_call.1} parent=1 // pred_check
      _
    $region43: #{tpu_custom_call.1} parent=1 // pred_check_branch
      %336 = sbr.rel (0) target = $region45
    $region44: #{tpu_custom_call.1} parent=1 // pred_region
      %s338 = ssub.s32 256, 256
      %339 = vsyncadd [#allocation5], %s338
      %s340 = sshll.u32 [#allocation9], 4
      %s341 = int_to_ptr.vmem [resolvable:$true] %s340
      %346 = dma.vmem_to_hbm [thread:$0]  %s341, 256, %s5, [#allocation5], 128, 128, 8
    $region45: #{tpu_custom_call.1} parent=1 // pred_fallthru
      _
    // Predicated region
    $region46: #{tpu_custom_call.1} parent=1 // pred_check
      _
    $region47: #{tpu_custom_call.1} parent=1 // pred_check_branch
      %348 = sbr.rel (0) target = $region49
    $region48: #{tpu_custom_call.1} parent=1 // pred_region
      %349 = dma.done [#allocation5], 256
    $region49: #{tpu_custom_call.1} parent=1 // pred_fallthru
      _
    %350 = vsyncpa [#allocation4], 1
    %351 = vsyncpa [#allocation7], 1
    %352 = vsyncpa [#allocation5], 1

</llo_original>
